<compile_context>
chip_gen: v5e
topology: v5e:2x2
jax: 0.10.0
libtpu: 0.0.40
codegen_flags: <defaults>
</compile_context>

<pallas_src>
import functools

import jax
import jax.numpy as jnp
from jax.experimental import pallas as pl
from jax.experimental.pallas import tpu as pltpu


# ---------------------------------------------------------------------------
# Phase 1: fused QKV projection, written head-major (b, heads, n, dim_head).
# ---------------------------------------------------------------------------
def _qkv_projection_kernel(x_ref, wq_ref, wk_ref, wv_ref, q_ref, k_ref, v_ref,
                           *, heads, dim_head, scale):
    x = x_ref[0]                                                   # (TN, dim)
    q = jnp.dot(x, wq_ref[...], preferred_element_type=jnp.float32) * scale
    k = jnp.dot(x, wk_ref[...], preferred_element_type=jnp.float32)
    v = jnp.dot(x, wv_ref[...], preferred_element_type=jnp.float32)
    # Head split happens exactly once per token here (static lane slices feeding
    # per-head stores), so the flash kernel never relayouts K/V per kv step.
    for h in range(heads):
        sl = slice(h * dim_head, (h + 1) * dim_head)
        q_ref[0, h] = q[:, sl].astype(q_ref.dtype)
        k_ref[0, h] = k[:, sl].astype(k_ref.dtype)
        v_ref[0, h] = v[:, sl].astype(v_ref.dtype)


def _qkv_projection(x, w_q, w_k, w_v, *, heads, dim_head, scale, block_n):
    b, n, dim = x.shape
    inner = heads * dim_head
    const = lambda bi, ni: (0, 0)  # noqa: E731
    head_major = jax.ShapeDtypeStruct((b, heads, n, dim_head), x.dtype)
    out_spec = pl.BlockSpec((1, heads, block_n, dim_head),
                            lambda bi, ni: (bi, 0, ni, 0))
    return pl.pallas_call(
        functools.partial(_qkv_projection_kernel,
                          heads=heads, dim_head=dim_head, scale=scale),
        out_shape=(head_major, head_major, head_major),
        grid_spec=pltpu.PrefetchScalarGridSpec(
            num_scalar_prefetch=0,
            grid=(b, n // block_n),
            in_specs=[
                pl.BlockSpec((1, block_n, dim), lambda bi, ni: (bi, ni, 0)),
                pl.BlockSpec((dim, inner), const),
                pl.BlockSpec((dim, inner), const),
                pl.BlockSpec((dim, inner), const),
            ],
            out_specs=[out_spec, out_spec, out_spec],
        ),
        compiler_params=pltpu.CompilerParams(
            dimension_semantics=("parallel", "parallel")),
    )(x, w_q, w_k, w_v)


# ---------------------------------------------------------------------------
# Phase 2: flash attention + fused output projection.
# ---------------------------------------------------------------------------
def _merge_heads(t):
    """(heads, seq, dim_head) -> (seq, heads*dim_head)   ('h n d -> n (h d)').

    Runs only once per q tile (finalize), so a concat of static lane slices is cheap.
    """
    return jnp.concatenate([t[h] for h in range(t.shape[0])], axis=-1)


def _flash_attention_kernel(q_ref, k_ref, v_ref, wo_ref, bo_ref, o_ref,
                            m_sc, l_sc, acc_sc):
    ki = pl.program_id(2)
    cdt = q_ref.dtype                       # MXU compute dtype (bf16 / f32)

    @pl.when(ki == 0)
    def _init():
        m_sc[...] = jnp.full_like(m_sc, -jnp.inf)
        l_sc[...] = jnp.zeros_like(l_sc)
        acc_sc[...] = jnp.zeros_like(acc_sc)

    q = q_ref[0]                            # (h, TQ, d), pre-scaled by dim_head**-0.5
    k = k_ref[0]                            # (h, TK, d)
    v = v_ref[0]                            # (h, TK, d)

    # Scores for all heads in one leading-batch dot_general, f32 accumulation.
    s = jnp.einsum("hqd,hkd->hqk", q, k, preferred_element_type=jnp.float32)

    # Online-softmax (flash) update; statistics stay in f32.
    # TODO(synk): on v6e/v7x the exponentials could run in bf16 (not v5e: no bf16 EUP),
    #             and the row-sum could move onto the MXU via a ones-column on v if the
    #             XLU ever becomes the binding slot.
    m_prev = m_sc[...]
    m_new = jnp.maximum(m_prev, s.max(axis=-1, keepdims=True))    # (h, TQ, 1)
    alpha = jnp.exp(m_prev - m_new)
    p = jnp.exp(s - m_new)
    l_sc[...] = alpha * l_sc[...] + p.sum(axis=-1, keepdims=True)
    acc_sc[...] = alpha * acc_sc[...] + jnp.einsum(
        "hqk,hkd->hqd", p.astype(cdt), v, preferred_element_type=jnp.float32)
    m_sc[...] = m_new

    @pl.when(ki == pl.num_programs(2) - 1)
    def _finalize():
        # Normalize, merge heads ('h n d -> n (h d)'), fused output projection + bias.
        o = acc_sc[...] * pl.reciprocal(l_sc[...], approx=True)    # (h, TQ, d) f32
        o = _merge_heads(o).astype(cdt)                            # (TQ, inner)
        y = jnp.dot(o, wo_ref[...], preferred_element_type=jnp.float32)
        y = y + bo_ref[...]                                        # (TQ, dim) f32
        # NOTE: lane-dense store when the model dim >= 128; for dim < 128 the store is
        #       partially masked (padding dim is a model-level choice).
        o_ref[0] = y.astype(o_ref.dtype)


def _flash_vmem_limit_bytes(*, heads, dim_head, dim, inner, block_q, block_k, itemsize):
    """Generation-aware scoped-VMEM request derived from the real working set."""
    f32 = 4
    streams = 2 * itemsize * heads * dim_head * (block_q + 2 * block_k)  # q/k/v, dbl-buf
    out_blk = 2 * itemsize * block_q * dim                               # out, dbl-buf
    weights = 2 * (itemsize * inner * dim + f32 * dim)                   # w_out, b_out
    scratch = f32 * heads * block_q * (dim_head + 2)                     # acc + m + l
    temps = 3 * f32 * heads * block_q * block_k                          # s / p / alpha
    ws = streams + out_blk + weights + scratch + temps
    # 2x margin for compiler temporaries and (8,128) lane padding; floor at the v6e/v7x
    # default scoped limit; cap at 48 MiB so v7x (64 MiB physical per TC) keeps headroom
    # while staying far below v5e/v6e's 128 MiB.
    return int(min(max(2 * ws, 32 * 1024 * 1024), 48 * 1024 * 1024))


def attention_forward(x, w_qkv, w_out, b_out=None, *, heads, dim_head,
                      block_q=256, block_k=256, block_proj=256):
    """Fused multi-head self-attention forward (inference semantics).

    x: (b, n, dim); w_qkv: (dim, 3*heads*dim_head) == to_qkv.weight.T;
    w_out: (heads*dim_head, dim) == to_out[0].weight.T; b_out: (dim,) or None.
    Dropout inside to_out is the identity (eval mode).  For the PyTorch
    `heads == 1 and dim_head == dim` case (to_out == Identity) pass an identity
    matrix as w_out and b_out=None.
    """
    b, n, dim = x.shape
    inner = heads * dim_head
    assert w_qkv.shape == (dim, 3 * inner), w_qkv.shape
    assert w_out.shape == (inner, dim), w_out.shape
    block_q = min(block_q, n)
    block_k = min(block_k, n)
    block_proj = min(block_proj, n)
    assert n % block_q == 0 and n % block_k == 0 and n % block_proj == 0, \
        "sequence length must be divisible by the block sizes"
    scale = float(dim_head) ** -0.5

    if b_out is None:
        b_out = jnp.zeros((dim,), jnp.float32)
    b_out2 = jnp.asarray(b_out, jnp.float32).reshape(1, dim)

    # Split the fused QKV weight once outside the kernels (plain XLA slices).
    w_q = w_qkv[:, 0 * inner:1 * inner]
    w_k = w_qkv[:, 1 * inner:2 * inner]
    w_v = w_qkv[:, 2 * inner:3 * inner]

    # Phase 1: project Q (pre-scaled), K, V exactly once, head-major in HBM.
    # TODO(synk): for dim_head < ~64 the (..., dim_head) minor axis is lane-padded in
    #             HBM/VMEM; if that dominates at production shapes, stream flat
    #             (b, n, inner) K/V with an in-kernel split, or cache per-batch-row K/V
    #             in VMEM scratch instead.
    q_h, k_h, v_h = _qkv_projection(x, w_q, w_k, w_v, heads=heads, dim_head=dim_head,
                                    scale=scale, block_n=block_proj)

    grid = (b, n // block_q, n // block_k)
    const = lambda bi, qi, ki: (0, 0)  # noqa: E731
    itemsize = jnp.dtype(x.dtype).itemsize
    q_tiles = n // block_q
    cost = pl.CostEstimate(
        flops=int(4 * b * heads * n * n * dim_head + 2 * b * n * inner * dim),
        transcendentals=int(b * heads * n * n),
        bytes_accessed=int(itemsize * (b * n * inner * (1 + 2 * q_tiles)
                                       + b * n * dim + inner * dim)))

    return pl.pallas_call(
        _flash_attention_kernel,
        out_shape=jax.ShapeDtypeStruct((b, n, dim), x.dtype),
        grid_spec=pltpu.PrefetchScalarGridSpec(
            num_scalar_prefetch=0,
            grid=grid,
            in_specs=[
                pl.BlockSpec((1, heads, block_q, dim_head),
                             lambda bi, qi, ki: (bi, 0, qi, 0)),   # Q (constant in ki)
                pl.BlockSpec((1, heads, block_k, dim_head),
                             lambda bi, qi, ki: (bi, 0, ki, 0)),   # K stream
                pl.BlockSpec((1, heads, block_k, dim_head),
                             lambda bi, qi, ki: (bi, 0, ki, 0)),   # V stream
                # Only the small output-projection weight/bias remain as constant
                # operands; the big QKV weights never enter this kernel.
                pl.BlockSpec((inner, dim), const),                 # w_out
                pl.BlockSpec((1, dim), const),                     # b_out
            ],
            out_specs=pl.BlockSpec((1, block_q, dim), lambda bi, qi, ki: (bi, qi, 0)),
            scratch_shapes=[
                pltpu.VMEM((heads, block_q, 1), jnp.float32),          # running max m
                pltpu.VMEM((heads, block_q, 1), jnp.float32),          # running sum l
                pltpu.VMEM((heads, block_q, dim_head), jnp.float32),   # output accum
            ],
        ),
        compiler_params=pltpu.CompilerParams(
            dimension_semantics=("parallel", "parallel", "arbitrary"),
            vmem_limit_bytes=_flash_vmem_limit_bytes(
                heads=heads, dim_head=dim_head, dim=dim, inner=inner,
                block_q=block_q, block_k=block_k, itemsize=itemsize),
        ),
        cost_estimate=cost,
    )(q_h, k_h, v_h, w_out, b_out2)


def attention_reference(x, w_qkv, w_out, b_out=None, *, heads, dim_head):
    """Pure-JAX (f32) reference matching the PyTorch forward in eval mode."""
    b, n, dim = x.shape
    scale = float(dim_head) ** -0.5
    xf = x.astype(jnp.float32)
    qkv = xf @ w_qkv.astype(jnp.float32)                       # (b, n, 3*inner)
    q, k, v = jnp.split(qkv, 3, axis=-1)

    def to_heads(t):                                           # 'b n (h d) -> b h n d'
        return t.reshape(b, n, heads, dim_head).transpose(0, 2, 1, 3)

    q, k, v = map(to_heads, (q, k, v))
    dots = jnp.einsum("bhid,bhjd->bhij", q, k) * scale
    attn = jax.nn.softmax(dots, axis=-1)
    out = jnp.einsum("bhij,bhjd->bhid", attn, v)
    out = out.transpose(0, 2, 1, 3).reshape(b, n, heads * dim_head)
    y = out @ w_out.astype(jnp.float32)
    if b_out is not None:
        y = y + b_out.astype(jnp.float32)
    return y


if __name__ == "__main__":
    # Small shapes consistent with the module (token-sequence input).
    b, n, dim = 2, 64, 32
    heads, dim_head = 4, 16
    inner = heads * dim_head

    key = jax.random.PRNGKey(0)
    kx, kq, ko, kb = jax.random.split(key, 4)
    x = jax.random.normal(kx, (b, n, dim), dtype=jnp.float32)
    w_qkv = jax.random.normal(kq, (dim, 3 * inner), dtype=jnp.float32) * 0.05
    w_out = jax.random.normal(ko, (inner, dim), dtype=jnp.float32) * 0.05
    b_out = jax.random.normal(kb, (dim,), dtype=jnp.float32) * 0.05  # to_out Linear bias

    # f32 path; block sizes chosen so the flash grid really tiles n: grid = (2, 2, 2).
    y = attention_forward(x, w_qkv, w_out, b_out, heads=heads, dim_head=dim_head,
                          block_q=32, block_k=32, block_proj=32)
    y = jax.block_until_ready(y)
    y_ref = attention_reference(x, w_qkv, w_out, b_out, heads=heads, dim_head=dim_head)
    assert y.shape == (b, n, dim)
    assert jnp.allclose(y.astype(jnp.float32), y_ref, atol=5e-3, rtol=5e-3), \
        "f32 mismatch vs reference"

    # bf16 path (MXU-friendly dtype; matmuls in bf16 with f32 accumulation).
    xb = x.astype(jnp.bfloat16)
    wqkvb = w_qkv.astype(jnp.bfloat16)
    woutb = w_out.astype(jnp.bfloat16)
    boutb = b_out.astype(jnp.bfloat16)
    yb = attention_forward(xb, wqkvb, woutb, boutb, heads=heads, dim_head=dim_head,
                           block_q=32, block_k=32, block_proj=32)
    yb = jax.block_until_ready(yb)
    yb_ref = attention_reference(xb, wqkvb, woutb, boutb, heads=heads, dim_head=dim_head)
    assert yb.dtype == jnp.bfloat16
    assert jnp.allclose(yb.astype(jnp.float32), yb_ref, atol=3e-2, rtol=3e-2), \
        "bf16 mismatch vs reference"

    print("KERNEL_OK")
</pallas_src>

<mosaic_0001>
module attributes {stable_mosaic.version = 11 : i64} {
  func.func @_qkv_projection_kernel(%arg0: i32, %arg1: i32, %arg2: memref<1x32x32xf32, #tpu.memory_space<vmem>>, %arg3: memref<32x64xf32, #tpu.memory_space<vmem>>, %arg4: memref<32x64xf32, #tpu.memory_space<vmem>>, %arg5: memref<32x64xf32, #tpu.memory_space<vmem>>, %arg6: memref<1x4x32x16xf32, #tpu.memory_space<vmem>>, %arg7: memref<1x4x32x16xf32, #tpu.memory_space<vmem>>, %arg8: memref<1x4x32x16xf32, #tpu.memory_space<vmem>>) attributes {dimension_semantics = [#tpu.dimension_semantics<parallel>, #tpu.dimension_semantics<parallel>], iteration_bounds = array<i64: 2, 2>, scalar_prefetch = 0 : i64, scratch_operands = 0 : i64, tpu.core_type = #tpu.core_type<tc>, window_params = [{transform_indices = @transform_0, window_bounds = array<i64: 1, 32, 32>}, {pipeline_mode = #tpu.pipeline_mode<synchronous>, transform_indices = @transform_1, window_bounds = array<i64: 32, 64>}, {pipeline_mode = #tpu.pipeline_mode<synchronous>, transform_indices = @transform_2, window_bounds = array<i64: 32, 64>}, {pipeline_mode = #tpu.pipeline_mode<synchronous>, transform_indices = @transform_3, window_bounds = array<i64: 32, 64>}, {transform_indices = @transform_4, window_bounds = array<i64: 1, 4, 32, 16>}, {transform_indices = @transform_5, window_bounds = array<i64: 1, 4, 32, 16>}, {transform_indices = @transform_6, window_bounds = array<i64: 1, 4, 32, 16>}]} {
    %c0 = arith.constant 0 : index
    %c0_0 = arith.constant 0 : index
    %c0_1 = arith.constant 0 : index
    %0 = vector.load %arg2[%c0, %c0_0, %c0_1] : memref<1x32x32xf32, #tpu.memory_space<vmem>>, vector<1x32x32xf32>
    %1 = vector.shape_cast %0 : vector<1x32x32xf32> to vector<32x32xf32>
    %c0_2 = arith.constant 0 : index
    %c0_3 = arith.constant 0 : index
    %2 = vector.load %arg3[%c0_2, %c0_3] : memref<32x64xf32, #tpu.memory_space<vmem>>, vector<32x64xf32>
    %cst = arith.constant dense<0.000000e+00> : vector<32x64xf32>
    %3 = tpu.matmul %1, %2, %cst {dimension_numbers = #tpu.dot_dimension_numbers<[1], [0], [0], [1], [0, 0, 1, 1], [], []>} : vector<32x32xf32>, vector<32x64xf32>, vector<32x64xf32> -> vector<32x64xf32>
    %cst_4 = arith.constant 2.500000e-01 : f32
    %4 = vector.broadcast %cst_4 : f32 to vector<32x64xf32>
    %5 = arith.mulf %3, %4 : vector<32x64xf32>
    %c0_5 = arith.constant 0 : index
    %c0_6 = arith.constant 0 : index
    %6 = vector.load %arg4[%c0_5, %c0_6] : memref<32x64xf32, #tpu.memory_space<vmem>>, vector<32x64xf32>
    %cst_7 = arith.constant dense<0.000000e+00> : vector<32x64xf32>
    %7 = tpu.matmul %1, %6, %cst_7 {dimension_numbers = #tpu.dot_dimension_numbers<[1], [0], [0], [1], [0, 0, 1, 1], [], []>} : vector<32x32xf32>, vector<32x64xf32>, vector<32x64xf32> -> vector<32x64xf32>
    %c0_8 = arith.constant 0 : index
    %c0_9 = arith.constant 0 : index
    %8 = vector.load %arg5[%c0_8, %c0_9] : memref<32x64xf32, #tpu.memory_space<vmem>>, vector<32x64xf32>
    %cst_10 = arith.constant dense<0.000000e+00> : vector<32x64xf32>
    %9 = tpu.matmul %1, %8, %cst_10 {dimension_numbers = #tpu.dot_dimension_numbers<[1], [0], [0], [1], [0, 0, 1, 1], [], []>} : vector<32x32xf32>, vector<32x64xf32>, vector<32x64xf32> -> vector<32x64xf32>
    %10 = vector.extract_strided_slice %5 {offsets = [0, 0], sizes = [32, 16], strides = [1, 1]} : vector<32x64xf32> to vector<32x16xf32>
    %c0_11 = arith.constant 0 : index
    %c0_12 = arith.constant 0 : index
    %c0_13 = arith.constant 0 : index
    %c0_14 = arith.constant 0 : index
    %11 = vector.load %arg6[%c0_11, %c0_12, %c0_13, %c0_14] : memref<1x4x32x16xf32, #tpu.memory_space<vmem>>, vector<1x1x32x16xf32>
    %12 = vector.shape_cast %11 : vector<1x1x32x16xf32> to vector<32x16xf32>
    %13 = vector.shape_cast %10 : vector<32x16xf32> to vector<1x1x32x16xf32>
    tpu.vector_store %arg6[%c0_11, %c0_12, %c0_13, %c0_14], %13 {strides = array<i32>} : memref<1x4x32x16xf32, #tpu.memory_space<vmem>>, vector<1x1x32x16xf32>,
    %14 = vector.extract_strided_slice %7 {offsets = [0, 0], sizes = [32, 16], strides = [1, 1]} : vector<32x64xf32> to vector<32x16xf32>
    %c0_15 = arith.constant 0 : index
    %c0_16 = arith.constant 0 : index
    %c0_17 = arith.constant 0 : index
    %c0_18 = arith.constant 0 : index
    %15 = vector.load %arg7[%c0_15, %c0_16, %c0_17, %c0_18] : memref<1x4x32x16xf32, #tpu.memory_space<vmem>>, vector<1x1x32x16xf32>
    %16 = vector.shape_cast %15 : vector<1x1x32x16xf32> to vector<32x16xf32>
    %17 = vector.shape_cast %14 : vector<32x16xf32> to vector<1x1x32x16xf32>
    tpu.vector_store %arg7[%c0_15, %c0_16, %c0_17, %c0_18], %17 {strides = array<i32>} : memref<1x4x32x16xf32, #tpu.memory_space<vmem>>, vector<1x1x32x16xf32>,
    %18 = vector.extract_strided_slice %9 {offsets = [0, 0], sizes = [32, 16], strides = [1, 1]} : vector<32x64xf32> to vector<32x16xf32>
    %c0_19 = arith.constant 0 : index
    %c0_20 = arith.constant 0 : index
    %c0_21 = arith.constant 0 : index
    %c0_22 = arith.constant 0 : index
    %19 = vector.load %arg8[%c0_19, %c0_20, %c0_21, %c0_22] : memref<1x4x32x16xf32, #tpu.memory_space<vmem>>, vector<1x1x32x16xf32>
    %20 = vector.shape_cast %19 : vector<1x1x32x16xf32> to vector<32x16xf32>
    %21 = vector.shape_cast %18 : vector<32x16xf32> to vector<1x1x32x16xf32>
    tpu.vector_store %arg8[%c0_19, %c0_20, %c0_21, %c0_22], %21 {strides = array<i32>} : memref<1x4x32x16xf32, #tpu.memory_space<vmem>>, vector<1x1x32x16xf32>,
    %22 = vector.extract_strided_slice %5 {offsets = [0, 16], sizes = [32, 16], strides = [1, 1]} : vector<32x64xf32> to vector<32x16xf32>
    %c0_23 = arith.constant 0 : index
    %c1 = arith.constant 1 : index
    %c0_24 = arith.constant 0 : index
    %c0_25 = arith.constant 0 : index
    %23 = vector.load %arg6[%c0_23, %c1, %c0_24, %c0_25] : memref<1x4x32x16xf32, #tpu.memory_space<vmem>>, vector<1x1x32x16xf32>
    %24 = vector.shape_cast %23 : vector<1x1x32x16xf32> to vector<32x16xf32>
    %25 = vector.shape_cast %22 : vector<32x16xf32> to vector<1x1x32x16xf32>
    tpu.vector_store %arg6[%c0_23, %c1, %c0_24, %c0_25], %25 {strides = array<i32>} : memref<1x4x32x16xf32, #tpu.memory_space<vmem>>, vector<1x1x32x16xf32>,
    %26 = vector.extract_strided_slice %7 {offsets = [0, 16], sizes = [32, 16], strides = [1, 1]} : vector<32x64xf32> to vector<32x16xf32>
    %c0_26 = arith.constant 0 : index
    %c1_27 = arith.constant 1 : index
    %c0_28 = arith.constant 0 : index
    %c0_29 = arith.constant 0 : index
    %27 = vector.load %arg7[%c0_26, %c1_27, %c0_28, %c0_29] : memref<1x4x32x16xf32, #tpu.memory_space<vmem>>, vector<1x1x32x16xf32>
    %28 = vector.shape_cast %27 : vector<1x1x32x16xf32> to vector<32x16xf32>
    %29 = vector.shape_cast %26 : vector<32x16xf32> to vector<1x1x32x16xf32>
    tpu.vector_store %arg7[%c0_26, %c1_27, %c0_28, %c0_29], %29 {strides = array<i32>} : memref<1x4x32x16xf32, #tpu.memory_space<vmem>>, vector<1x1x32x16xf32>,
    %30 = vector.extract_strided_slice %9 {offsets = [0, 16], sizes = [32, 16], strides = [1, 1]} : vector<32x64xf32> to vector<32x16xf32>
    %c0_30 = arith.constant 0 : index
    %c1_31 = arith.constant 1 : index
    %c0_32 = arith.constant 0 : index
    %c0_33 = arith.constant 0 : index
    %31 = vector.load %arg8[%c0_30, %c1_31, %c0_32, %c0_33] : memref<1x4x32x16xf32, #tpu.memory_space<vmem>>, vector<1x1x32x16xf32>
    %32 = vector.shape_cast %31 : vector<1x1x32x16xf32> to vector<32x16xf32>
    %33 = vector.shape_cast %30 : vector<32x16xf32> to vector<1x1x32x16xf32>
    tpu.vector_store %arg8[%c0_30, %c1_31, %c0_32, %c0_33], %33 {strides = array<i32>} : memref<1x4x32x16xf32, #tpu.memory_space<vmem>>, vector<1x1x32x16xf32>,
    %34 = vector.extract_strided_slice %5 {offsets = [0, 32], sizes = [32, 16], strides = [1, 1]} : vector<32x64xf32> to vector<32x16xf32>
    %c0_34 = arith.constant 0 : index
    %c2 = arith.constant 2 : index
    %c0_35 = arith.constant 0 : index
    %c0_36 = arith.constant 0 : index
    %35 = vector.load %arg6[%c0_34, %c2, %c0_35, %c0_36] : memref<1x4x32x16xf32, #tpu.memory_space<vmem>>, vector<1x1x32x16xf32>
    %36 = vector.shape_cast %35 : vector<1x1x32x16xf32> to vector<32x16xf32>
    %37 = vector.shape_cast %34 : vector<32x16xf32> to vector<1x1x32x16xf32>
    tpu.vector_store %arg6[%c0_34, %c2, %c0_35, %c0_36], %37 {strides = array<i32>} : memref<1x4x32x16xf32, #tpu.memory_space<vmem>>, vector<1x1x32x16xf32>,
    %38 = vector.extract_strided_slice %7 {offsets = [0, 32], sizes = [32, 16], strides = [1, 1]} : vector<32x64xf32> to vector<32x16xf32>
    %c0_37 = arith.constant 0 : index
    %c2_38 = arith.constant 2 : index
    %c0_39 = arith.constant 0 : index
    %c0_40 = arith.constant 0 : index
    %39 = vector.load %arg7[%c0_37, %c2_38, %c0_39, %c0_40] : memref<1x4x32x16xf32, #tpu.memory_space<vmem>>, vector<1x1x32x16xf32>
    %40 = vector.shape_cast %39 : vector<1x1x32x16xf32> to vector<32x16xf32>
    %41 = vector.shape_cast %38 : vector<32x16xf32> to vector<1x1x32x16xf32>
    tpu.vector_store %arg7[%c0_37, %c2_38, %c0_39, %c0_40], %41 {strides = array<i32>} : memref<1x4x32x16xf32, #tpu.memory_space<vmem>>, vector<1x1x32x16xf32>,
    %42 = vector.extract_strided_slice %9 {offsets = [0, 32], sizes = [32, 16], strides = [1, 1]} : vector<32x64xf32> to vector<32x16xf32>
    %c0_41 = arith.constant 0 : index
    %c2_42 = arith.constant 2 : index
    %c0_43 = arith.constant 0 : index
    %c0_44 = arith.constant 0 : index
    %43 = vector.load %arg8[%c0_41, %c2_42, %c0_43, %c0_44] : memref<1x4x32x16xf32, #tpu.memory_space<vmem>>, vector<1x1x32x16xf32>
    %44 = vector.shape_cast %43 : vector<1x1x32x16xf32> to vector<32x16xf32>
    %45 = vector.shape_cast %42 : vector<32x16xf32> to vector<1x1x32x16xf32>
    tpu.vector_store %arg8[%c0_41, %c2_42, %c0_43, %c0_44], %45 {strides = array<i32>} : memref<1x4x32x16xf32, #tpu.memory_space<vmem>>, vector<1x1x32x16xf32>,
    %46 = vector.extract_strided_slice %5 {offsets = [0, 48], sizes = [32, 16], strides = [1, 1]} : vector<32x64xf32> to vector<32x16xf32>
    %c0_45 = arith.constant 0 : index
    %c3 = arith.constant 3 : index
    %c0_46 = arith.constant 0 : index
    %c0_47 = arith.constant 0 : index
    %47 = vector.load %arg6[%c0_45, %c3, %c0_46, %c0_47] : memref<1x4x32x16xf32, #tpu.memory_space<vmem>>, vector<1x1x32x16xf32>
    %48 = vector.shape_cast %47 : vector<1x1x32x16xf32> to vector<32x16xf32>
    %49 = vector.shape_cast %46 : vector<32x16xf32> to vector<1x1x32x16xf32>
    tpu.vector_store %arg6[%c0_45, %c3, %c0_46, %c0_47], %49 {strides = array<i32>} : memref<1x4x32x16xf32, #tpu.memory_space<vmem>>, vector<1x1x32x16xf32>,
    %50 = vector.extract_strided_slice %7 {offsets = [0, 48], sizes = [32, 16], strides = [1, 1]} : vector<32x64xf32> to vector<32x16xf32>
    %c0_48 = arith.constant 0 : index
    %c3_49 = arith.constant 3 : index
    %c0_50 = arith.constant 0 : index
    %c0_51 = arith.constant 0 : index
    %51 = vector.load %arg7[%c0_48, %c3_49, %c0_50, %c0_51] : memref<1x4x32x16xf32, #tpu.memory_space<vmem>>, vector<1x1x32x16xf32>
    %52 = vector.shape_cast %51 : vector<1x1x32x16xf32> to vector<32x16xf32>
    %53 = vector.shape_cast %50 : vector<32x16xf32> to vector<1x1x32x16xf32>
    tpu.vector_store %arg7[%c0_48, %c3_49, %c0_50, %c0_51], %53 {strides = array<i32>} : memref<1x4x32x16xf32, #tpu.memory_space<vmem>>, vector<1x1x32x16xf32>,
    %54 = vector.extract_strided_slice %9 {offsets = [0, 48], sizes = [32, 16], strides = [1, 1]} : vector<32x64xf32> to vector<32x16xf32>
    %c0_52 = arith.constant 0 : index
    %c3_53 = arith.constant 3 : index
    %c0_54 = arith.constant 0 : index
    %c0_55 = arith.constant 0 : index
    %55 = vector.load %arg8[%c0_52, %c3_53, %c0_54, %c0_55] : memref<1x4x32x16xf32, #tpu.memory_space<vmem>>, vector<1x1x32x16xf32>
    %56 = vector.shape_cast %55 : vector<1x1x32x16xf32> to vector<32x16xf32>
    %57 = vector.shape_cast %54 : vector<32x16xf32> to vector<1x1x32x16xf32>
    tpu.vector_store %arg8[%c0_52, %c3_53, %c0_54, %c0_55], %57 {strides = array<i32>} : memref<1x4x32x16xf32, #tpu.memory_space<vmem>>, vector<1x1x32x16xf32>,
    return
  }
  func.func @transform_0(%arg0: i32, %arg1: i32) -> (i32, i32, i32) {
    %c0_i32 = arith.constant 0 : i32
    %c0_i32_0 = arith.constant 0 : i32
    return %arg0, %arg1, %c0_i32 : i32, i32, i32
  }
  func.func @transform_1(%arg0: i32, %arg1: i32) -> (i32, i32) {
    %c0_i32 = arith.constant 0 : i32
    %c0_i32_0 = arith.constant 0 : i32
    %c0_i32_1 = arith.constant 0 : i32
    return %c0_i32, %c0_i32_0 : i32, i32
  }
  func.func @transform_2(%arg0: i32, %arg1: i32) -> (i32, i32) {
    %c0_i32 = arith.constant 0 : i32
    %c0_i32_0 = arith.constant 0 : i32
    %c0_i32_1 = arith.constant 0 : i32
    return %c0_i32, %c0_i32_0 : i32, i32
  }
  func.func @transform_3(%arg0: i32, %arg1: i32) -> (i32, i32) {
    %c0_i32 = arith.constant 0 : i32
    %c0_i32_0 = arith.constant 0 : i32
    %c0_i32_1 = arith.constant 0 : i32
    return %c0_i32, %c0_i32_0 : i32, i32
  }
  func.func @transform_4(%arg0: i32, %arg1: i32) -> (i32, i32, i32, i32) {
    %c0_i32 = arith.constant 0 : i32
    %c0_i32_0 = arith.constant 0 : i32
    %c0_i32_1 = arith.constant 0 : i32
    return %arg0, %c0_i32, %arg1, %c0_i32_0 : i32, i32, i32, i32
  }
  func.func @transform_5(%arg0: i32, %arg1: i32) -> (i32, i32, i32, i32) {
    %c0_i32 = arith.constant 0 : i32
    %c0_i32_0 = arith.constant 0 : i32
    %c0_i32_1 = arith.constant 0 : i32
    return %arg0, %c0_i32, %arg1, %c0_i32_0 : i32, i32, i32, i32
  }
  func.func @transform_6(%arg0: i32, %arg1: i32) -> (i32, i32, i32, i32) {
    %c0_i32 = arith.constant 0 : i32
    %c0_i32_0 = arith.constant 0 : i32
    %c0_i32_1 = arith.constant 0 : i32
    return %arg0, %c0_i32, %arg1, %c0_i32_0 : i32, i32, i32, i32
  }
}

</mosaic_0001>

<llo_original>
// kernel: tpu_custom_call.1
$region0: #{tpu_custom_call.1}
  #allocation0 [shape = 'u32[]', space=smem, size = 0x4, offset = 0x4, fixed_abs, tag = 'smem constant byte address 0x4 - core index']
  #allocation1 [shape = 'u32[72,128]{1,0:T(1,128)}', space=vmem, size = 0x9000, scoped, tag = 'internal scratch']
  %s0 = inlined_call_operand.vmem [shape: f32[2,64,32], index: 0, kind: input, shape index: {}]
  %s1 = inlined_call_operand.vmem [shape: f32[32,64], index: 1, kind: input, shape index: {}]
  %s2 = inlined_call_operand.vmem [shape: f32[32,64], index: 2, kind: input, shape index: {}]
  %s3 = inlined_call_operand.vmem [shape: f32[32,64], index: 3, kind: input, shape index: {}]
  %s4 = inlined_call_operand.vmem [shape: f32[2,4,64,16], index: 4, kind: output, shape index: {0}]
  %s5 = inlined_call_operand.vmem [shape: f32[2,4,64,16], index: 5, kind: output, shape index: {1}]
  %s6 = inlined_call_operand.vmem [shape: f32[2,4,64,16], index: 6, kind: output, shape index: {2}]
  %7 = xla_tuple %s4, %s5, %s6
  %s8 = sld [smem:[#allocation0]]
  $region167: #{tpu_custom_call.1} parent=0
    _
  %s10 = ssub.s32 1, %s8
  %s11 = scalar_select 0, %s10, %s8
  $region1: #{tpu_custom_call.1} parent=0
    #allocation2 [shape = 'u8[131072]{0}', space=vmem, size = 0x20000, scoped, tag = 'output window, operand 0']
    #allocation3 [shape = 'u8[131072]{0}', space=vmem, size = 0x20000, scoped, tag = 'output window, operand 1']
    #allocation4 [shape = 'u8[131072]{0}', space=vmem, size = 0x20000, scoped, tag = 'output window, operand 2']
    loop: start=0, step=1, limit=6
    $region2: #{tpu_custom_call.1} parent=1 // loop_pre_header
      _
    $region3: #{tpu_custom_call.1} parent=1 // loop_header
      %s13 = sphi 0, %s17
      %p14 = scmp.ge.s32.totalorder %s13, 6
      %s20 = sphi 0, %s32
      %s21 = sphi 0, %s28
      %s22 = sphi 0, %s20
      %s23 = sphi 0, %s21
      %s24 = sphi 0, %s22
      %s25 = sphi 0, %s23
      %s37 = sphi 0, %s39
      %s40 = sphi 0, %s37
      %s41 = sphi 0, %s40
      %s57 = sphi 0, %s41
      %s61 = sphi 0, %s61
      %s63 = sphi 0, %s61
      %s64 = sphi 0, %s63
      %s78 = sphi 0, %s64
      %s82 = sphi 0, %s82
      %s84 = sphi 0, %s82
      %s85 = sphi 0, %s84
      %s99 = sphi 0, %s85
      %s103 = sphi 0, %s103
      %s105 = sphi 0, %s103
      %s106 = sphi 0, %s105
      %s120 = sphi 0, %s106
      %s128 = sphi 0, %s130
      %s131 = sphi 0, %s128
      %s132 = sphi 0, %s131
      %s148 = sphi 0, %s132
      %s156 = sphi 0, %s158
      %s159 = sphi 0, %s156
      %s160 = sphi 0, %s159
      %s176 = sphi 0, %s160
      %s184 = sphi 0, %s186
      %s187 = sphi 0, %s184
      %s188 = sphi 0, %s187
      %s204 = sphi 0, %s188
    $region4: #{tpu_custom_call.1} parent=1 // loop_header_branch
      %16 = sbr.rel (%p14) target = $region8
    $region5: #{tpu_custom_call.1} parent=1 // loop_body
      %s18 = ssub.s32 %s13, 1
      %s19 = ssub.s32 %s13, 2
      %s26 = sadd.s32 1, %s21
      %p27 = scmp.ge.s32.totalorder %s26, 2
      %s28 = scalar_select %p27, 0, %s26
      %s29 = sadd.s32 1, %s20
      %s30 = scalar_select %p27, %s29, %s20
      %p31 = scmp.ge.s32.totalorder %s30, 2
      %s32 = scalar_select %p31, 0, %s30
      %s33 = ssub.s32 %s20, %s32
      %s34 = ssub.s32 %s21, %s28
      %s35 = sor.u32 %s33, %s34
      %p36 = scmp.eq.s32.totalorder %s35, 0
      %s38 = sadd.s32 %s37, 1
      %s39 = scalar_select %p36, %s37, %s38
      %p42 = pneg %p36
      %p43 = scmp.eq.s32.totalorder %s13, 3
      %p44 = por %p42, %p43
      %p45 = scmp.ne.s32.totalorder %s37, %s40
      %p46 = scmp.eq.s32.totalorder %s13, 0
      %p47 = por %p45, %p46
      %p48 = scmp.ne.s32.totalorder %s37, %s40
      %p49 = scmp.eq.s32.totalorder %s18, 3
      %p50 = por %p48, %p49
      %p51 = scmp.ne.s32.totalorder %s40, %s41
      %p52 = scmp.eq.s32.totalorder %s18, 0
      %p53 = por %p51, %p52
      %p54 = scmp.ne.s32.totalorder %s40, %s41
      %p55 = scmp.eq.s32.totalorder %s19, 3
      %p56 = por %p54, %p55
      %p58 = scmp.ne.s32.totalorder %s41, %s57
      %p59 = scmp.eq.s32.totalorder %s19, 0
      %p60 = por %p58, %p59
      %s62 = sadd.s32 %s61, 1
      %p65 = scmp.eq.s32.totalorder %s13, 3
      %p66 = scmp.ne.s32.totalorder %s61, %s63
      %p67 = scmp.eq.s32.totalorder %s13, 0
      %p68 = por %p66, %p67
      %p69 = scmp.ne.s32.totalorder %s61, %s63
      %p70 = scmp.eq.s32.totalorder %s18, 3
      %p71 = por %p69, %p70
      %p72 = scmp.ne.s32.totalorder %s63, %s64
      %p73 = scmp.eq.s32.totalorder %s18, 0
      %p74 = por %p72, %p73
      %p75 = scmp.ne.s32.totalorder %s63, %s64
      %p76 = scmp.eq.s32.totalorder %s19, 3
      %p77 = por %p75, %p76
      %p79 = scmp.ne.s32.totalorder %s64, %s78
      %p80 = scmp.eq.s32.totalorder %s19, 0
      %p81 = por %p79, %p80
      %s83 = sadd.s32 %s82, 1
      %p86 = scmp.eq.s32.totalorder %s13, 3
      %p87 = scmp.ne.s32.totalorder %s82, %s84
      %p88 = scmp.eq.s32.totalorder %s13, 0
      %p89 = por %p87, %p88
      %p90 = scmp.ne.s32.totalorder %s82, %s84
      %p91 = scmp.eq.s32.totalorder %s18, 3
      %p92 = por %p90, %p91
      %p93 = scmp.ne.s32.totalorder %s84, %s85
      %p94 = scmp.eq.s32.totalorder %s18, 0
      %p95 = por %p93, %p94
      %p96 = scmp.ne.s32.totalorder %s84, %s85
      %p97 = scmp.eq.s32.totalorder %s19, 3
      %p98 = por %p96, %p97
      %p100 = scmp.ne.s32.totalorder %s85, %s99
      %p101 = scmp.eq.s32.totalorder %s19, 0
      %p102 = por %p100, %p101
      %s104 = sadd.s32 %s103, 1
      %p107 = scmp.eq.s32.totalorder %s13, 3
      %p108 = scmp.ne.s32.totalorder %s103, %s105
      %p109 = scmp.eq.s32.totalorder %s13, 0
      %p110 = por %p108, %p109
      %p111 = scmp.ne.s32.totalorder %s103, %s105
      %p112 = scmp.eq.s32.totalorder %s18, 3
      %p113 = por %p111, %p112
      %p114 = scmp.ne.s32.totalorder %s105, %s106
      %p115 = scmp.eq.s32.totalorder %s18, 0
      %p116 = por %p114, %p115
      %p117 = scmp.ne.s32.totalorder %s105, %s106
      %p118 = scmp.eq.s32.totalorder %s19, 3
      %p119 = por %p117, %p118
      %p121 = scmp.ne.s32.totalorder %s106, %s120
      %p122 = scmp.eq.s32.totalorder %s19, 0
      %p123 = por %p121, %p122
      %s124 = ssub.s32 %s20, %s32
      %s125 = ssub.s32 %s21, %s28
      %s126 = sor.u32 %s124, %s125
      %p127 = scmp.eq.s32.totalorder %s126, 0
      %s129 = sadd.s32 %s128, 1
      %s130 = scalar_select %p127, %s128, %s129
      %p133 = pneg %p127
      %p134 = scmp.eq.s32.totalorder %s13, 3
      %p135 = por %p133, %p134
      %p136 = scmp.ne.s32.totalorder %s128, %s131
      %p137 = scmp.eq.s32.totalorder %s13, 0
      %p138 = por %p136, %p137
      %p139 = scmp.ne.s32.totalorder %s128, %s131
      %p140 = scmp.eq.s32.totalorder %s18, 3
      %p141 = por %p139, %p140
      %p142 = scmp.ne.s32.totalorder %s131, %s132
      %p143 = scmp.eq.s32.totalorder %s18, 0
      %p144 = por %p142, %p143
      %p145 = scmp.ne.s32.totalorder %s131, %s132
      %p146 = scmp.eq.s32.totalorder %s19, 3
      %p147 = por %p145, %p146
      %p149 = scmp.ne.s32.totalorder %s132, %s148
      %p150 = scmp.eq.s32.totalorder %s19, 0
      %p151 = por %p149, %p150
      %s152 = ssub.s32 %s20, %s32
      %s153 = ssub.s32 %s21, %s28
      %s154 = sor.u32 %s152, %s153
      %p155 = scmp.eq.s32.totalorder %s154, 0
      %s157 = sadd.s32 %s156, 1
      %s158 = scalar_select %p155, %s156, %s157
      %p161 = pneg %p155
      %p162 = scmp.eq.s32.totalorder %s13, 3
      %p163 = por %p161, %p162
      %p164 = scmp.ne.s32.totalorder %s156, %s159
      %p165 = scmp.eq.s32.totalorder %s13, 0
      %p166 = por %p164, %p165
      %p167 = scmp.ne.s32.totalorder %s156, %s159
      %p168 = scmp.eq.s32.totalorder %s18, 3
      %p169 = por %p167, %p168
      %p170 = scmp.ne.s32.totalorder %s159, %s160
      %p171 = scmp.eq.s32.totalorder %s18, 0
      %p172 = por %p170, %p171
      %p173 = scmp.ne.s32.totalorder %s159, %s160
      %p174 = scmp.eq.s32.totalorder %s19, 3
      %p175 = por %p173, %p174
      %p177 = scmp.ne.s32.totalorder %s160, %s176
      %p178 = scmp.eq.s32.totalorder %s19, 0
      %p179 = por %p177, %p178
      %s180 = ssub.s32 %s20, %s32
      %s181 = ssub.s32 %s21, %s28
      %s182 = sor.u32 %s180, %s181
      %p183 = scmp.eq.s32.totalorder %s182, 0
      %s185 = sadd.s32 %s184, 1
      %s186 = scalar_select %p183, %s184, %s185
      %p189 = pneg %p183
      %p190 = scmp.eq.s32.totalorder %s13, 3
      %p191 = por %p189, %p190
      %p192 = scmp.ne.s32.totalorder %s184, %s187
      %p193 = scmp.eq.s32.totalorder %s13, 0
      %p194 = por %p192, %p193
      %p195 = scmp.ne.s32.totalorder %s184, %s187
      %p196 = scmp.eq.s32.totalorder %s18, 3
      %p197 = por %p195, %p196
      %p198 = scmp.ne.s32.totalorder %s187, %s188
      %p199 = scmp.eq.s32.totalorder %s18, 0
      %p200 = por %p198, %p199
      %p201 = scmp.ne.s32.totalorder %s187, %s188
      %p202 = scmp.eq.s32.totalorder %s19, 3
      %p203 = por %p201, %p202
      %p205 = scmp.ne.s32.totalorder %s188, %s204
      %p206 = scmp.eq.s32.totalorder %s19, 0
      %p207 = por %p205, %p206
      %p208 = scmp.le.s32.totalorder 1, %s13
      %p209 = scmp.lt.s32.totalorder %s13, 5
      %p210 = pnand %p208, %p209
      %p211 = pneg %p210
      // Predicated region
      $region9: #{tpu_custom_call.1} parent=5 // pred_check
        _
      $region10: #{tpu_custom_call.1} parent=5 // pred_check_branch
        %213 = sbr.rel (%p210) target = $region12
      $region11: #{tpu_custom_call.1} parent=5 // pred_region
        %s214 = ssub.s32 %s13, 1
        // Predicated region
        $region13: #{tpu_custom_call.1} parent=11 // pred_check
          %p215 = pneg %p74
        $region14: #{tpu_custom_call.1} parent=11 // pred_check_branch
          %217 = sbr.rel (%p215) target = $region16
        $region15: #{tpu_custom_call.1} parent=11 // pred_region
          _
        $region16: #{tpu_custom_call.1} parent=11 // pred_fallthru
          _
        // Predicated region
        $region17: #{tpu_custom_call.1} parent=11 // pred_check
          %p218 = pneg %p95
        $region18: #{tpu_custom_call.1} parent=11 // pred_check_branch
          %220 = sbr.rel (%p218) target = $region20
        $region19: #{tpu_custom_call.1} parent=11 // pred_region
          _
        $region20: #{tpu_custom_call.1} parent=11 // pred_fallthru
          _
        // Predicated region
        $region21: #{tpu_custom_call.1} parent=11 // pred_check
          %p221 = pneg %p116
        $region22: #{tpu_custom_call.1} parent=11 // pred_check_branch
          %223 = sbr.rel (%p221) target = $region24
        $region23: #{tpu_custom_call.1} parent=11 // pred_region
          _
        $region24: #{tpu_custom_call.1} parent=11 // pred_fallthru
          _
      $region12: #{tpu_custom_call.1} parent=5 // pred_fallthru
        _
      %p224 = scmp.lt.s32.totalorder %s13, 4
      // Predicated region
      $region25: #{tpu_custom_call.1} parent=5 // pred_check
        %p225 = pneg %p224
      $region26: #{tpu_custom_call.1} parent=5 // pred_check_branch
        %227 = sbr.rel (%p225) target = $region28
      $region27: #{tpu_custom_call.1} parent=5 // pred_region
        // Predicated region
        $region29: #{tpu_custom_call.1} parent=27 // pred_check
          %p228 = pneg %p47
        $region30: #{tpu_custom_call.1} parent=27 // pred_check_branch
          %230 = sbr.rel (%p228) target = $region32
        $region31: #{tpu_custom_call.1} parent=27 // pred_region
          %s231 = smul.u32 4, %s21
          %p232 = scmp.lt.s32.totalorder %s20, 1
          %s233 = scalar_select %p232, %s20, 1
          %p234 = scmp.lt.s32.totalorder %s231, 7
          %s235 = scalar_select %p234, %s231, 7
          %s236 = smul.addr %s233, 8
          %s237 = sadd.s32 %s235, %s236
          %s238 = smul.addr %s237, 8
          %s239 = scalar_lea.vmem %s0, %s238
          %s240 = smul.u32 4, %s21
        $region32: #{tpu_custom_call.1} parent=27 // pred_fallthru
          _
      $region28: #{tpu_custom_call.1} parent=5 // pred_fallthru
        _
      %p241 = scmp.le.s32.totalorder 1, %s13
      %p242 = scmp.lt.s32.totalorder %s13, 5
      %p243 = pnand %p241, %p242
      %p244 = pneg %p243
      // Predicated region
      $region33: #{tpu_custom_call.1} parent=5 // pred_check
        _
      $region34: #{tpu_custom_call.1} parent=5 // pred_check_branch
        %246 = sbr.rel (%p243) target = $region36
      $region35: #{tpu_custom_call.1} parent=5 // pred_region
        %s247 = ssub.s32 %s13, 1
        %s248 = smul.u32 4, %s23
        %p249 = scmp.lt.s32.totalorder %s22, 1
        %s250 = scalar_select %p249, %s22, 1
        %p251 = scmp.lt.s32.totalorder %s248, 7
        %s252 = scalar_select %p251, %s248, 7
        %s253 = smul.addr %s250, 8
        %s254 = sadd.s32 %s252, %s253
        %s255 = smul.addr %s254, 8
        %s256 = scalar_lea.vmem %s0, %s255
        %p257 = pneg %p53
        %p258 = pneg %p50
        %p259 = pneg %p74
        %p260 = pneg %p71
        %p261 = pneg %p95
        %p262 = pneg %p92
        %p263 = pneg %p116
        %p264 = pneg %p113
        %p265 = pneg %p144
        %p266 = pneg %p141
        %s267 = sand.u32 %s131, 1
        %s268 = sand.u32 %s131, 1
        %s269 = smul.addr %s268, 128
        %s270 = scalar_lea.vmem [#allocation2], %s269
        %p271 = pneg %p172
        %p272 = pneg %p169
        %s273 = sand.u32 %s159, 1
        %s274 = sand.u32 %s159, 1
        %s275 = smul.addr %s274, 128
        %s276 = scalar_lea.vmem [#allocation3], %s275
        %p277 = pneg %p200
        %p278 = pneg %p197
        %s279 = sand.u32 %s187, 1
        %s280 = sand.u32 %s187, 1
        %s281 = smul.addr %s280, 128
        %s282 = scalar_lea.vmem [#allocation4], %s281
        %s283 = smul.u32 4, %s23
        %p284 = scmp.lt.s32.totalorder %s22, 1
        %s285 = scalar_select %p284, %s22, 1
        %p286 = scmp.lt.s32.totalorder %s283, 7
        %s287 = scalar_select %p286, %s283, 7
        %s288 = smul.addr %s285, 8
        %s289 = sadd.s32 %s287, %s288
        %s290 = smul.addr %s289, 8
        %s291 = scalar_lea.vmem %s0, %s290
        %s292 = smul.u32 4, %s23
        %s293 = smul.u32 4, %s23
        %s294 = smul.u32 4, %s23
        %s295 = smul.u32 4, %s23
        %v296 = vld [vmem:[%s291] sm:$0xff]
        %v297 = vld [vmem:[%s291 + $0x8] sm:$0xff]
        %v298 = vld [vmem:[%s291 + $0x10] sm:$0xff]
        %v299 = vld [vmem:[%s291 + $0x18] sm:$0xff]
        %v300 = vld [vmem:[%s1] sm:$0xff]
        %v301 = vld [vmem:[%s1 + $0x8] sm:$0xff]
        %v302 = vld [vmem:[%s1 + $0x10] sm:$0xff]
        %v303 = vld [vmem:[%s1 + $0x18] sm:$0xff]
        %vm304 = vcmask 261120
        %v306 = vsel %vm304, %v296, 0
        %v309 = vsel %vm304, %v297, 0
        %v312 = vsel %vm304, %v298, 0
        %v315 = vsel %vm304, %v299, 0
        %317 = vmatpush.msra.mxu0 0.0
        %318 = vmatpush.msra.mxu0 0.0
        %319 = vmatpush.msra.mxu0 0.0
        %320 = vmatpush.msra.mxu0 0.0
        %321 = vmatpush.msra.mxu0 0.0
        %322 = vmatpush.msra.mxu0 0.0
        %323 = vmatpush.msra.mxu0 0.0
        %324 = vmatpush.msra.mxu0 0.0
        %325 = vmatpush.msra.mxu0 0.0
        %326 = vmatpush.msra.mxu0 0.0
        %327 = vmatpush.msra.mxu0 0.0
        %328 = vmatpush.msra.mxu0 0.0
        %329 = vmatpush.msra.mxu0 %v303
        %330 = vmatpush.msra.mxu0 %v302
        %331 = vmatpush.msra.mxu0 %v301
        %332 = vmatpush.msra.mxu0 %v300
        %333 = vmatmul.f32.gmra.mxu0 %v306
        %v334 = vpop.f32.mrf.mxu0
        %v335 = vadd.f32 0.0, %v334
        %336 = vmatmul.f32.gmra.mxu0 %v309
        %v337 = vpop.f32.mrf.mxu0
        %v338 = vadd.f32 0.0, %v337
        %339 = vmatmul.f32.gmra.mxu0 %v312
        %v340 = vpop.f32.mrf.mxu0
        %v341 = vadd.f32 0.0, %v340
        %342 = vmatmul.f32.gmra.mxu0 %v315
        %v343 = vpop.f32.mrf.mxu0
        %v344 = vadd.f32 0.0, %v343
        %345 = vdwg.mxu0
        %v346 = vmul.f32 %v335, 0.25
        %v347 = vmul.f32 %v338, 0.25
        %v348 = vmul.f32 %v341, 0.25
        %v349 = vmul.f32 %v344, 0.25
        %v350 = vld [vmem:[%s2] sm:$0xff]
        %v351 = vld [vmem:[%s2 + $0x8] sm:$0xff]
        %v352 = vld [vmem:[%s2 + $0x10] sm:$0xff]
        %v353 = vld [vmem:[%s2 + $0x18] sm:$0xff]
        %354 = vmatpush.msra.mxu0 0.0
        %355 = vmatpush.msra.mxu0 0.0
        %356 = vmatpush.msra.mxu0 0.0
        %357 = vmatpush.msra.mxu0 0.0
        %358 = vmatpush.msra.mxu0 0.0
        %359 = vmatpush.msra.mxu0 0.0
        %360 = vmatpush.msra.mxu0 0.0
        %361 = vmatpush.msra.mxu0 0.0
        %362 = vmatpush.msra.mxu0 0.0
        %363 = vmatpush.msra.mxu0 0.0
        %364 = vmatpush.msra.mxu0 0.0
        %365 = vmatpush.msra.mxu0 0.0
        %366 = vmatpush.msra.mxu0 %v353
        %367 = vmatpush.msra.mxu0 %v352
        %368 = vmatpush.msra.mxu0 %v351
        %369 = vmatpush.msra.mxu0 %v350
        %370 = vmatmul.f32.gmra.mxu0 %v306
        %v371 = vpop.f32.mrf.mxu0
        %v372 = vadd.f32 0.0, %v371
        %373 = vmatmul.f32.gmra.mxu0 %v309
        %v374 = vpop.f32.mrf.mxu0
        %v375 = vadd.f32 0.0, %v374
        %376 = vmatmul.f32.gmra.mxu0 %v312
        %v377 = vpop.f32.mrf.mxu0
        %v378 = vadd.f32 0.0, %v377
        %379 = vmatmul.f32.gmra.mxu0 %v315
        %v380 = vpop.f32.mrf.mxu0
        %v381 = vadd.f32 0.0, %v380
        %382 = vdwg.mxu0
        %v383 = vld [vmem:[%s3] sm:$0xff]
        %v384 = vld [vmem:[%s3 + $0x8] sm:$0xff]
        %v385 = vld [vmem:[%s3 + $0x10] sm:$0xff]
        %v386 = vld [vmem:[%s3 + $0x18] sm:$0xff]
        %387 = vmatpush.msra.mxu0 0.0
        %388 = vmatpush.msra.mxu0 0.0
        %389 = vmatpush.msra.mxu0 0.0
        %390 = vmatpush.msra.mxu0 0.0
        %391 = vmatpush.msra.mxu0 0.0
        %392 = vmatpush.msra.mxu0 0.0
        %393 = vmatpush.msra.mxu0 0.0
        %394 = vmatpush.msra.mxu0 0.0
        %395 = vmatpush.msra.mxu0 0.0
        %396 = vmatpush.msra.mxu0 0.0
        %397 = vmatpush.msra.mxu0 0.0
        %398 = vmatpush.msra.mxu0 0.0
        %399 = vmatpush.msra.mxu0 %v386
        %400 = vmatpush.msra.mxu0 %v385
        %401 = vmatpush.msra.mxu0 %v384
        %402 = vmatpush.msra.mxu0 %v383
        %403 = vmatmul.f32.gmra.mxu0 %v306
        %v404 = vpop.f32.mrf.mxu0
        %v405 = vadd.f32 0.0, %v404
        %406 = vmatmul.f32.gmra.mxu0 %v309
        %v407 = vpop.f32.mrf.mxu0
        %v408 = vadd.f32 0.0, %v407
        %409 = vmatmul.f32.gmra.mxu0 %v312
        %v410 = vpop.f32.mrf.mxu0
        %v411 = vadd.f32 0.0, %v410
        %412 = vmatmul.f32.gmra.mxu0 %v315
        %v413 = vpop.f32.mrf.mxu0
        %v414 = vadd.f32 0.0, %v413
        %415 = vdwg.mxu0
        %vm416 = vcmask 130048
        %417 = vst.msk [vmem:[%s270] sm:$0xff] %vm416, %v346
        %418 = vst.msk [vmem:[%s270 + $0x8] sm:$0xff] %vm416, %v347
        %419 = vst.msk [vmem:[%s270 + $0x10] sm:$0xff] %vm416, %v348
        %420 = vst.msk [vmem:[%s270 + $0x18] sm:$0xff] %vm416, %v349
        %421 = vst.msk [vmem:[%s276] sm:$0xff] %vm416, %v372
        %422 = vst.msk [vmem:[%s276 + $0x8] sm:$0xff] %vm416, %v375
        %423 = vst.msk [vmem:[%s276 + $0x10] sm:$0xff] %vm416, %v378
        %424 = vst.msk [vmem:[%s276 + $0x18] sm:$0xff] %vm416, %v381
        %425 = vst.msk [vmem:[%s282] sm:$0xff] %vm416, %v405
        %426 = vst.msk [vmem:[%s282 + $0x8] sm:$0xff] %vm416, %v408
        %427 = vst.msk [vmem:[%s282 + $0x10] sm:$0xff] %vm416, %v411
        %428 = vst.msk [vmem:[%s282 + $0x18] sm:$0xff] %vm416, %v414
        %433 = vrot.lane.b32.xlu0 %v346, 112
        %v434 = vpop.permute.xlu0 %433
        %435 = vrot.lane.b32.xlu0 %v347, 112
        %v436 = vpop.permute.xlu0 %435
        %437 = vrot.lane.b32.xlu0 %v348, 112
        %v438 = vpop.permute.xlu0 %437
        %439 = vrot.lane.b32.xlu0 %v349, 112
        %v440 = vpop.permute.xlu0 %439
        %s445 = scalar_lea.vmem %s270, 32 [#allocation2]
        %446 = vst.msk [vmem:[%s445] sm:$0xff] %vm416, %v434
        %447 = vst.msk [vmem:[%s445 + $0x8] sm:$0xff] %vm416, %v436
        %448 = vst.msk [vmem:[%s445 + $0x10] sm:$0xff] %vm416, %v438
        %449 = vst.msk [vmem:[%s445 + $0x18] sm:$0xff] %vm416, %v440
        %454 = vrot.lane.b32.xlu0 %v372, 112
        %v455 = vpop.permute.xlu0 %454
        %456 = vrot.lane.b32.xlu0 %v375, 112
        %v457 = vpop.permute.xlu0 %456
        %458 = vrot.lane.b32.xlu0 %v378, 112
        %v459 = vpop.permute.xlu0 %458
        %460 = vrot.lane.b32.xlu0 %v381, 112
        %v461 = vpop.permute.xlu0 %460
        %s466 = scalar_lea.vmem %s276, 32 [#allocation3]
        %467 = vst.msk [vmem:[%s466] sm:$0xff] %vm416, %v455
        %468 = vst.msk [vmem:[%s466 + $0x8] sm:$0xff] %vm416, %v457
        %469 = vst.msk [vmem:[%s466 + $0x10] sm:$0xff] %vm416, %v459
        %470 = vst.msk [vmem:[%s466 + $0x18] sm:$0xff] %vm416, %v461
        %475 = vrot.lane.b32.xlu0 %v405, 112
        %v476 = vpop.permute.xlu0 %475
        %477 = vrot.lane.b32.xlu0 %v408, 112
        %v478 = vpop.permute.xlu0 %477
        %479 = vrot.lane.b32.xlu0 %v411, 112
        %v480 = vpop.permute.xlu0 %479
        %481 = vrot.lane.b32.xlu0 %v414, 112
        %v482 = vpop.permute.xlu0 %481
        %s487 = scalar_lea.vmem %s282, 32 [#allocation4]
        %488 = vst.msk [vmem:[%s487] sm:$0xff] %vm416, %v476
        %489 = vst.msk [vmem:[%s487 + $0x8] sm:$0xff] %vm416, %v478
        %490 = vst.msk [vmem:[%s487 + $0x10] sm:$0xff] %vm416, %v480
        %491 = vst.msk [vmem:[%s487 + $0x18] sm:$0xff] %vm416, %v482
        %492 = vrot.lane.b32.xlu0 %v346, 96
        %v493 = vpop.permute.xlu0 %492
        %494 = vrot.lane.b32.xlu0 %v347, 96
        %v495 = vpop.permute.xlu0 %494
        %496 = vrot.lane.b32.xlu0 %v348, 96
        %v497 = vpop.permute.xlu0 %496
        %498 = vrot.lane.b32.xlu0 %v349, 96
        %v499 = vpop.permute.xlu0 %498
        %s504 = scalar_lea.vmem %s270, 64 [#allocation2]
        %505 = vst.msk [vmem:[%s504] sm:$0xff] %vm416, %v493
        %506 = vst.msk [vmem:[%s504 + $0x8] sm:$0xff] %vm416, %v495
        %507 = vst.msk [vmem:[%s504 + $0x10] sm:$0xff] %vm416, %v497
        %508 = vst.msk [vmem:[%s504 + $0x18] sm:$0xff] %vm416, %v499
        %509 = vrot.lane.b32.xlu0 %v372, 96
        %v510 = vpop.permute.xlu0 %509
        %511 = vrot.lane.b32.xlu0 %v375, 96
        %v512 = vpop.permute.xlu0 %511
        %513 = vrot.lane.b32.xlu0 %v378, 96
        %v514 = vpop.permute.xlu0 %513
        %515 = vrot.lane.b32.xlu0 %v381, 96
        %v516 = vpop.permute.xlu0 %515
        %s521 = scalar_lea.vmem %s276, 64 [#allocation3]
        %522 = vst.msk [vmem:[%s521] sm:$0xff] %vm416, %v510
        %523 = vst.msk [vmem:[%s521 + $0x8] sm:$0xff] %vm416, %v512
        %524 = vst.msk [vmem:[%s521 + $0x10] sm:$0xff] %vm416, %v514
        %525 = vst.msk [vmem:[%s521 + $0x18] sm:$0xff] %vm416, %v516
        %526 = vrot.lane.b32.xlu0 %v405, 96
        %v527 = vpop.permute.xlu0 %526
        %528 = vrot.lane.b32.xlu0 %v408, 96
        %v529 = vpop.permute.xlu0 %528
        %530 = vrot.lane.b32.xlu0 %v411, 96
        %v531 = vpop.permute.xlu0 %530
        %532 = vrot.lane.b32.xlu0 %v414, 96
        %v533 = vpop.permute.xlu0 %532
        %s538 = scalar_lea.vmem %s282, 64 [#allocation4]
        %539 = vst.msk [vmem:[%s538] sm:$0xff] %vm416, %v527
        %540 = vst.msk [vmem:[%s538 + $0x8] sm:$0xff] %vm416, %v529
        %541 = vst.msk [vmem:[%s538 + $0x10] sm:$0xff] %vm416, %v531
        %542 = vst.msk [vmem:[%s538 + $0x18] sm:$0xff] %vm416, %v533
        %543 = vrot.lane.b32.xlu0 %v346, 80
        %v544 = vpop.permute.xlu0 %543
        %545 = vrot.lane.b32.xlu0 %v347, 80
        %v546 = vpop.permute.xlu0 %545
        %547 = vrot.lane.b32.xlu0 %v348, 80
        %v548 = vpop.permute.xlu0 %547
        %549 = vrot.lane.b32.xlu0 %v349, 80
        %v550 = vpop.permute.xlu0 %549
        %s555 = scalar_lea.vmem %s270, 96 [#allocation2]
        %556 = vst.msk [vmem:[%s555] sm:$0xff] %vm416, %v544
        %557 = vst.msk [vmem:[%s555 + $0x8] sm:$0xff] %vm416, %v546
        %558 = vst.msk [vmem:[%s555 + $0x10] sm:$0xff] %vm416, %v548
        %559 = vst.msk [vmem:[%s555 + $0x18] sm:$0xff] %vm416, %v550
        %560 = vrot.lane.b32.xlu0 %v372, 80
        %v561 = vpop.permute.xlu0 %560
        %562 = vrot.lane.b32.xlu0 %v375, 80
        %v563 = vpop.permute.xlu0 %562
        %564 = vrot.lane.b32.xlu0 %v378, 80
        %v565 = vpop.permute.xlu0 %564
        %566 = vrot.lane.b32.xlu0 %v381, 80
        %v567 = vpop.permute.xlu0 %566
        %s572 = scalar_lea.vmem %s276, 96 [#allocation3]
        %573 = vst.msk [vmem:[%s572] sm:$0xff] %vm416, %v561
        %574 = vst.msk [vmem:[%s572 + $0x8] sm:$0xff] %vm416, %v563
        %575 = vst.msk [vmem:[%s572 + $0x10] sm:$0xff] %vm416, %v565
        %576 = vst.msk [vmem:[%s572 + $0x18] sm:$0xff] %vm416, %v567
        %577 = vrot.lane.b32.xlu0 %v405, 80
        %v578 = vpop.permute.xlu0 %577
        %579 = vrot.lane.b32.xlu0 %v408, 80
        %v580 = vpop.permute.xlu0 %579
        %581 = vrot.lane.b32.xlu0 %v411, 80
        %v582 = vpop.permute.xlu0 %581
        %583 = vrot.lane.b32.xlu0 %v414, 80
        %v584 = vpop.permute.xlu0 %583
        %s589 = scalar_lea.vmem %s282, 96 [#allocation4]
        %590 = vst.msk [vmem:[%s589] sm:$0xff] %vm416, %v578
        %591 = vst.msk [vmem:[%s589 + $0x8] sm:$0xff] %vm416, %v580
        %592 = vst.msk [vmem:[%s589 + $0x10] sm:$0xff] %vm416, %v582
        %593 = vst.msk [vmem:[%s589 + $0x18] sm:$0xff] %vm416, %v584
        %s594 = sand.u32 %s131, 1
        %s595 = sand.u32 %s131, 1
        %s596 = smul.addr %s595, 128
        %s597 = scalar_lea.vmem [#allocation2], %s596
        %s598 = sand.u32 %s159, 1
        %s599 = sand.u32 %s159, 1
        %s600 = smul.addr %s599, 128
        %s601 = scalar_lea.vmem [#allocation3], %s600
        %s602 = sand.u32 %s187, 1
        %s603 = sand.u32 %s187, 1
        %s604 = smul.addr %s603, 128
        %s605 = scalar_lea.vmem [#allocation4], %s604
        // Predicated region
        $region37: #{tpu_custom_call.1} parent=35 // pred_check
          %p606 = pneg %p141
        $region38: #{tpu_custom_call.1} parent=35 // pred_check_branch
          %608 = sbr.rel (%p606) target = $region40
        $region39: #{tpu_custom_call.1} parent=35 // pred_region
          %s609 = smul.u32 4, %s23
          %s610 = smul.addr %s22, 32
          %s611 = sadd.s32 %s609, %s610
          %s612 = smul.addr %s611, 8
          %s613 = scalar_lea.vmem %s4, %s612
          // Predicated region
          $region41: #{tpu_custom_call.1} parent=39 // pred_check
            _
          $region42: #{tpu_custom_call.1} parent=39 // pred_check_branch
            %615 = sbr.rel (0) target = $region44
          $region43: #{tpu_custom_call.1} parent=39 // pred_region
            // Predicated region
            $region45: #{tpu_custom_call.1} parent=43 // pred_check
              _
            $region46: #{tpu_custom_call.1} parent=43 // pred_check_branch
              %617 = sbr.rel (0) target = $region48
            $region47: #{tpu_custom_call.1} parent=43 // pred_region
              // Predicated region
              $region60: #{tpu_custom_call.1} parent=47 // pred_check
                _
              $region61: #{tpu_custom_call.1} parent=47 // pred_check_branch
                %663 = sbr.rel (0) target = $region63
              $region62: #{tpu_custom_call.1} parent=47 // pred_region
                loop: start=0, step=1, limit=1
                $region64: #{tpu_custom_call.1} parent=62 // loop_pre_header
                  _
                $region65: #{tpu_custom_call.1} parent=62 // loop_header
                  %s665 = sphi 0, %s669
                  %p666 = scmp.ge.s32.totalorder %s665, 1
                  %s670 = sphi %s597, %s597
                  %s671 = sphi %s613, %s613
                $region66: #{tpu_custom_call.1} parent=62 // loop_header_branch
                  %668 = sbr.rel (%p666) target = $region70
                $region67: #{tpu_custom_call.1} parent=62 // loop_body
                  %v672 = vld [vmem:[%s670] sm:$0xff]
                  %673 = vst [vmem:[%s671] sm:$0xff] %v672
                  %v674 = vld [vmem:[%s670 + $0x8] sm:$0xff]
                  %675 = vst [vmem:[%s671 + $0x8] sm:$0xff] %v674
                  %v676 = vld [vmem:[%s670 + $0x10] sm:$0xff]
                  %677 = vst [vmem:[%s671 + $0x10] sm:$0xff] %v676
                  %v678 = vld [vmem:[%s670 + $0x18] sm:$0xff]
                  %679 = vst [vmem:[%s671 + $0x18] sm:$0xff] %v678
                  %v680 = vld [vmem:[%s670 + $0x20] sm:$0xff]
                  %681 = vst [vmem:[%s671 + $0x40] sm:$0xff] %v680
                  %v682 = vld [vmem:[%s670 + $0x28] sm:$0xff]
                  %683 = vst [vmem:[%s671 + $0x48] sm:$0xff] %v682
                  %v684 = vld [vmem:[%s670 + $0x30] sm:$0xff]
                  %685 = vst [vmem:[%s671 + $0x50] sm:$0xff] %v684
                  %v686 = vld [vmem:[%s670 + $0x38] sm:$0xff]
                  %687 = vst [vmem:[%s671 + $0x58] sm:$0xff] %v686
                  %v688 = vld [vmem:[%s670 + $0x40] sm:$0xff]
                  %689 = vst [vmem:[%s671 + $0x80] sm:$0xff] %v688
                  %v690 = vld [vmem:[%s670 + $0x48] sm:$0xff]
                  %691 = vst [vmem:[%s671 + $0x88] sm:$0xff] %v690
                  %v692 = vld [vmem:[%s670 + $0x50] sm:$0xff]
                  %693 = vst [vmem:[%s671 + $0x90] sm:$0xff] %v692
                  %v694 = vld [vmem:[%s670 + $0x58] sm:$0xff]
                  %695 = vst [vmem:[%s671 + $0x98] sm:$0xff] %v694
                  %v696 = vld [vmem:[%s670 + $0x60] sm:$0xff]
                  %697 = vst [vmem:[%s671 + $0xc0] sm:$0xff] %v696
                  %v698 = vld [vmem:[%s670 + $0x68] sm:$0xff]
                  %699 = vst [vmem:[%s671 + $0xc8] sm:$0xff] %v698
                  %v700 = vld [vmem:[%s670 + $0x70] sm:$0xff]
                  %701 = vst [vmem:[%s671 + $0xd0] sm:$0xff] %v700
                  %v702 = vld [vmem:[%s670 + $0x78] sm:$0xff]
                  %703 = vst [vmem:[%s671 + $0xd8] sm:$0xff] %v702
                $region68: #{tpu_custom_call.1} parent=62 // loop_footer
                  %s669 = sadd.s32 1, %s665
                $region69: #{tpu_custom_call.1} parent=62 // loop_footer_branch
                  %664 = sbr.rel target = $region65
                $region70: #{tpu_custom_call.1} parent=62 // loop_exit
                  _
              $region63: #{tpu_custom_call.1} parent=47 // pred_fallthru
                _
              // Predicated region
              $region71: #{tpu_custom_call.1} parent=47 // pred_check
                _
              $region72: #{tpu_custom_call.1} parent=47 // pred_check_branch
                %705 = sbr.rel target = $region74
              $region73: #{tpu_custom_call.1} parent=47 // pred_region
                _
              $region74: #{tpu_custom_call.1} parent=47 // pred_fallthru
                _
            $region48: #{tpu_custom_call.1} parent=43 // pred_fallthru
              _
            // Predicated region
            $region49: #{tpu_custom_call.1} parent=43 // pred_check
              _
            $region50: #{tpu_custom_call.1} parent=43 // pred_check_branch
              %619 = sbr.rel target = $region52
            $region51: #{tpu_custom_call.1} parent=43 // pred_region
              %s621 = ssub.s32 256, 1
              loop: start=0, step=1, limit=1
              $region53: #{tpu_custom_call.1} parent=51 // loop_pre_header
                _
              $region54: #{tpu_custom_call.1} parent=51 // loop_header
                %s623 = sphi 0, %s627
                %p624 = scmp.ge.s32.totalorder %s623, 1
                %s628 = sphi %s597, %s597
                %s629 = sphi %s613, %s613
              $region55: #{tpu_custom_call.1} parent=51 // loop_header_branch
                %626 = sbr.rel (%p624) target = $region59
              $region56: #{tpu_custom_call.1} parent=51 // loop_body
                %v630 = vld [vmem:[%s628] sm:%s621]
                %631 = vst [vmem:[%s629] sm:%s621] %v630
                %v632 = vld [vmem:[%s628 + $0x8] sm:%s621]
                %633 = vst [vmem:[%s629 + $0x8] sm:%s621] %v632
                %v634 = vld [vmem:[%s628 + $0x10] sm:%s621]
                %635 = vst [vmem:[%s629 + $0x10] sm:%s621] %v634
                %v636 = vld [vmem:[%s628 + $0x18] sm:%s621]
                %637 = vst [vmem:[%s629 + $0x18] sm:%s621] %v636
                %v638 = vld [vmem:[%s628 + $0x20] sm:%s621]
                %639 = vst [vmem:[%s629 + $0x40] sm:%s621] %v638
                %v640 = vld [vmem:[%s628 + $0x28] sm:%s621]
                %641 = vst [vmem:[%s629 + $0x48] sm:%s621] %v640
                %v642 = vld [vmem:[%s628 + $0x30] sm:%s621]
                %643 = vst [vmem:[%s629 + $0x50] sm:%s621] %v642
                %v644 = vld [vmem:[%s628 + $0x38] sm:%s621]
                %645 = vst [vmem:[%s629 + $0x58] sm:%s621] %v644
                %v646 = vld [vmem:[%s628 + $0x40] sm:%s621]
                %647 = vst [vmem:[%s629 + $0x80] sm:%s621] %v646
                %v648 = vld [vmem:[%s628 + $0x48] sm:%s621]
                %649 = vst [vmem:[%s629 + $0x88] sm:%s621] %v648
                %v650 = vld [vmem:[%s628 + $0x50] sm:%s621]
                %651 = vst [vmem:[%s629 + $0x90] sm:%s621] %v650
                %v652 = vld [vmem:[%s628 + $0x58] sm:%s621]
                %653 = vst [vmem:[%s629 + $0x98] sm:%s621] %v652
                %v654 = vld [vmem:[%s628 + $0x60] sm:%s621]
                %655 = vst [vmem:[%s629 + $0xc0] sm:%s621] %v654
                %v656 = vld [vmem:[%s628 + $0x68] sm:%s621]
                %657 = vst [vmem:[%s629 + $0xc8] sm:%s621] %v656
                %v658 = vld [vmem:[%s628 + $0x70] sm:%s621]
                %659 = vst [vmem:[%s629 + $0xd0] sm:%s621] %v658
                %v660 = vld [vmem:[%s628 + $0x78] sm:%s621]
                %661 = vst [vmem:[%s629 + $0xd8] sm:%s621] %v660
              $region57: #{tpu_custom_call.1} parent=51 // loop_footer
                %s627 = sadd.s32 1, %s623
              $region58: #{tpu_custom_call.1} parent=51 // loop_footer_branch
                %622 = sbr.rel target = $region54
              $region59: #{tpu_custom_call.1} parent=51 // loop_exit
                _
            $region52: #{tpu_custom_call.1} parent=43 // pred_fallthru
              _
          $region44: #{tpu_custom_call.1} parent=39 // pred_fallthru
            _
          %706 = vnop
        $region40: #{tpu_custom_call.1} parent=35 // pred_fallthru
          _
        // Predicated region
        $region75: #{tpu_custom_call.1} parent=35 // pred_check
          %p707 = pneg %p169
        $region76: #{tpu_custom_call.1} parent=35 // pred_check_branch
          %709 = sbr.rel (%p707) target = $region78
        $region77: #{tpu_custom_call.1} parent=35 // pred_region
          %s710 = smul.u32 4, %s23
          %s711 = smul.addr %s22, 32
          %s712 = sadd.s32 %s710, %s711
          %s713 = smul.addr %s712, 8
          %s714 = scalar_lea.vmem %s5, %s713
          // Predicated region
          $region79: #{tpu_custom_call.1} parent=77 // pred_check
            _
          $region80: #{tpu_custom_call.1} parent=77 // pred_check_branch
            %716 = sbr.rel (0) target = $region82
          $region81: #{tpu_custom_call.1} parent=77 // pred_region
            // Predicated region
            $region83: #{tpu_custom_call.1} parent=81 // pred_check
              _
            $region84: #{tpu_custom_call.1} parent=81 // pred_check_branch
              %718 = sbr.rel (0) target = $region86
            $region85: #{tpu_custom_call.1} parent=81 // pred_region
              // Predicated region
              $region98: #{tpu_custom_call.1} parent=85 // pred_check
                _
              $region99: #{tpu_custom_call.1} parent=85 // pred_check_branch
                %764 = sbr.rel (0) target = $region101
              $region100: #{tpu_custom_call.1} parent=85 // pred_region
                loop: start=0, step=1, limit=1
                $region102: #{tpu_custom_call.1} parent=100 // loop_pre_header
                  _
                $region103: #{tpu_custom_call.1} parent=100 // loop_header
                  %s766 = sphi 0, %s770
                  %p767 = scmp.ge.s32.totalorder %s766, 1
                  %s771 = sphi %s601, %s601
                  %s772 = sphi %s714, %s714
                $region104: #{tpu_custom_call.1} parent=100 // loop_header_branch
                  %769 = sbr.rel (%p767) target = $region108
                $region105: #{tpu_custom_call.1} parent=100 // loop_body
                  %v773 = vld [vmem:[%s771] sm:$0xff]
                  %774 = vst [vmem:[%s772] sm:$0xff] %v773
                  %v775 = vld [vmem:[%s771 + $0x8] sm:$0xff]
                  %776 = vst [vmem:[%s772 + $0x8] sm:$0xff] %v775
                  %v777 = vld [vmem:[%s771 + $0x10] sm:$0xff]
                  %778 = vst [vmem:[%s772 + $0x10] sm:$0xff] %v777
                  %v779 = vld [vmem:[%s771 + $0x18] sm:$0xff]
                  %780 = vst [vmem:[%s772 + $0x18] sm:$0xff] %v779
                  %v781 = vld [vmem:[%s771 + $0x20] sm:$0xff]
                  %782 = vst [vmem:[%s772 + $0x40] sm:$0xff] %v781
                  %v783 = vld [vmem:[%s771 + $0x28] sm:$0xff]
                  %784 = vst [vmem:[%s772 + $0x48] sm:$0xff] %v783
                  %v785 = vld [vmem:[%s771 + $0x30] sm:$0xff]
                  %786 = vst [vmem:[%s772 + $0x50] sm:$0xff] %v785
                  %v787 = vld [vmem:[%s771 + $0x38] sm:$0xff]
                  %788 = vst [vmem:[%s772 + $0x58] sm:$0xff] %v787
                  %v789 = vld [vmem:[%s771 + $0x40] sm:$0xff]
                  %790 = vst [vmem:[%s772 + $0x80] sm:$0xff] %v789
                  %v791 = vld [vmem:[%s771 + $0x48] sm:$0xff]
                  %792 = vst [vmem:[%s772 + $0x88] sm:$0xff] %v791
                  %v793 = vld [vmem:[%s771 + $0x50] sm:$0xff]
                  %794 = vst [vmem:[%s772 + $0x90] sm:$0xff] %v793
                  %v795 = vld [vmem:[%s771 + $0x58] sm:$0xff]
                  %796 = vst [vmem:[%s772 + $0x98] sm:$0xff] %v795
                  %v797 = vld [vmem:[%s771 + $0x60] sm:$0xff]
                  %798 = vst [vmem:[%s772 + $0xc0] sm:$0xff] %v797
                  %v799 = vld [vmem:[%s771 + $0x68] sm:$0xff]
                  %800 = vst [vmem:[%s772 + $0xc8] sm:$0xff] %v799
                  %v801 = vld [vmem:[%s771 + $0x70] sm:$0xff]
                  %802 = vst [vmem:[%s772 + $0xd0] sm:$0xff] %v801
                  %v803 = vld [vmem:[%s771 + $0x78] sm:$0xff]
                  %804 = vst [vmem:[%s772 + $0xd8] sm:$0xff] %v803
                $region106: #{tpu_custom_call.1} parent=100 // loop_footer
                  %s770 = sadd.s32 1, %s766
                $region107: #{tpu_custom_call.1} parent=100 // loop_footer_branch
                  %765 = sbr.rel target = $region103
                $region108: #{tpu_custom_call.1} parent=100 // loop_exit
                  _
              $region101: #{tpu_custom_call.1} parent=85 // pred_fallthru
                _
              // Predicated region
              $region109: #{tpu_custom_call.1} parent=85 // pred_check
                _
              $region110: #{tpu_custom_call.1} parent=85 // pred_check_branch
                %806 = sbr.rel target = $region112
              $region111: #{tpu_custom_call.1} parent=85 // pred_region
                _
              $region112: #{tpu_custom_call.1} parent=85 // pred_fallthru
                _
            $region86: #{tpu_custom_call.1} parent=81 // pred_fallthru
              _
            // Predicated region
            $region87: #{tpu_custom_call.1} parent=81 // pred_check
              _
            $region88: #{tpu_custom_call.1} parent=81 // pred_check_branch
              %720 = sbr.rel target = $region90
            $region89: #{tpu_custom_call.1} parent=81 // pred_region
              %s722 = ssub.s32 256, 1
              loop: start=0, step=1, limit=1
              $region91: #{tpu_custom_call.1} parent=89 // loop_pre_header
                _
              $region92: #{tpu_custom_call.1} parent=89 // loop_header
                %s724 = sphi 0, %s728
                %p725 = scmp.ge.s32.totalorder %s724, 1
                %s729 = sphi %s601, %s601
                %s730 = sphi %s714, %s714
              $region93: #{tpu_custom_call.1} parent=89 // loop_header_branch
                %727 = sbr.rel (%p725) target = $region97
              $region94: #{tpu_custom_call.1} parent=89 // loop_body
                %v731 = vld [vmem:[%s729] sm:%s722]
                %732 = vst [vmem:[%s730] sm:%s722] %v731
                %v733 = vld [vmem:[%s729 + $0x8] sm:%s722]
                %734 = vst [vmem:[%s730 + $0x8] sm:%s722] %v733
                %v735 = vld [vmem:[%s729 + $0x10] sm:%s722]
                %736 = vst [vmem:[%s730 + $0x10] sm:%s722] %v735
                %v737 = vld [vmem:[%s729 + $0x18] sm:%s722]
                %738 = vst [vmem:[%s730 + $0x18] sm:%s722] %v737
                %v739 = vld [vmem:[%s729 + $0x20] sm:%s722]
                %740 = vst [vmem:[%s730 + $0x40] sm:%s722] %v739
                %v741 = vld [vmem:[%s729 + $0x28] sm:%s722]
                %742 = vst [vmem:[%s730 + $0x48] sm:%s722] %v741
                %v743 = vld [vmem:[%s729 + $0x30] sm:%s722]
                %744 = vst [vmem:[%s730 + $0x50] sm:%s722] %v743
                %v745 = vld [vmem:[%s729 + $0x38] sm:%s722]
                %746 = vst [vmem:[%s730 + $0x58] sm:%s722] %v745
                %v747 = vld [vmem:[%s729 + $0x40] sm:%s722]
                %748 = vst [vmem:[%s730 + $0x80] sm:%s722] %v747
                %v749 = vld [vmem:[%s729 + $0x48] sm:%s722]
                %750 = vst [vmem:[%s730 + $0x88] sm:%s722] %v749
                %v751 = vld [vmem:[%s729 + $0x50] sm:%s722]
                %752 = vst [vmem:[%s730 + $0x90] sm:%s722] %v751
                %v753 = vld [vmem:[%s729 + $0x58] sm:%s722]
                %754 = vst [vmem:[%s730 + $0x98] sm:%s722] %v753
                %v755 = vld [vmem:[%s729 + $0x60] sm:%s722]
                %756 = vst [vmem:[%s730 + $0xc0] sm:%s722] %v755
                %v757 = vld [vmem:[%s729 + $0x68] sm:%s722]
                %758 = vst [vmem:[%s730 + $0xc8] sm:%s722] %v757
                %v759 = vld [vmem:[%s729 + $0x70] sm:%s722]
                %760 = vst [vmem:[%s730 + $0xd0] sm:%s722] %v759
                %v761 = vld [vmem:[%s729 + $0x78] sm:%s722]
                %762 = vst [vmem:[%s730 + $0xd8] sm:%s722] %v761
              $region95: #{tpu_custom_call.1} parent=89 // loop_footer
                %s728 = sadd.s32 1, %s724
              $region96: #{tpu_custom_call.1} parent=89 // loop_footer_branch
                %723 = sbr.rel target = $region92
              $region97: #{tpu_custom_call.1} parent=89 // loop_exit
                _
            $region90: #{tpu_custom_call.1} parent=81 // pred_fallthru
              _
          $region82: #{tpu_custom_call.1} parent=77 // pred_fallthru
            _
          %807 = vnop
        $region78: #{tpu_custom_call.1} parent=35 // pred_fallthru
          _
        // Predicated region
        $region113: #{tpu_custom_call.1} parent=35 // pred_check
          %p808 = pneg %p197
        $region114: #{tpu_custom_call.1} parent=35 // pred_check_branch
          %810 = sbr.rel (%p808) target = $region116
        $region115: #{tpu_custom_call.1} parent=35 // pred_region
          %s811 = smul.u32 4, %s23
          %s812 = smul.addr %s22, 32
          %s813 = sadd.s32 %s811, %s812
          %s814 = smul.addr %s813, 8
          %s815 = scalar_lea.vmem %s6, %s814
          // Predicated region
          $region117: #{tpu_custom_call.1} parent=115 // pred_check
            _
          $region118: #{tpu_custom_call.1} parent=115 // pred_check_branch
            %817 = sbr.rel (0) target = $region120
          $region119: #{tpu_custom_call.1} parent=115 // pred_region
            // Predicated region
            $region121: #{tpu_custom_call.1} parent=119 // pred_check
              _
            $region122: #{tpu_custom_call.1} parent=119 // pred_check_branch
              %819 = sbr.rel (0) target = $region124
            $region123: #{tpu_custom_call.1} parent=119 // pred_region
              // Predicated region
              $region136: #{tpu_custom_call.1} parent=123 // pred_check
                _
              $region137: #{tpu_custom_call.1} parent=123 // pred_check_branch
                %865 = sbr.rel (0) target = $region139
              $region138: #{tpu_custom_call.1} parent=123 // pred_region
                loop: start=0, step=1, limit=1
                $region140: #{tpu_custom_call.1} parent=138 // loop_pre_header
                  _
                $region141: #{tpu_custom_call.1} parent=138 // loop_header
                  %s867 = sphi 0, %s871
                  %p868 = scmp.ge.s32.totalorder %s867, 1
                  %s872 = sphi %s605, %s605
                  %s873 = sphi %s815, %s815
                $region142: #{tpu_custom_call.1} parent=138 // loop_header_branch
                  %870 = sbr.rel (%p868) target = $region146
                $region143: #{tpu_custom_call.1} parent=138 // loop_body
                  %v874 = vld [vmem:[%s872] sm:$0xff]
                  %875 = vst [vmem:[%s873] sm:$0xff] %v874
                  %v876 = vld [vmem:[%s872 + $0x8] sm:$0xff]
                  %877 = vst [vmem:[%s873 + $0x8] sm:$0xff] %v876
                  %v878 = vld [vmem:[%s872 + $0x10] sm:$0xff]
                  %879 = vst [vmem:[%s873 + $0x10] sm:$0xff] %v878
                  %v880 = vld [vmem:[%s872 + $0x18] sm:$0xff]
                  %881 = vst [vmem:[%s873 + $0x18] sm:$0xff] %v880
                  %v882 = vld [vmem:[%s872 + $0x20] sm:$0xff]
                  %883 = vst [vmem:[%s873 + $0x40] sm:$0xff] %v882
                  %v884 = vld [vmem:[%s872 + $0x28] sm:$0xff]
                  %885 = vst [vmem:[%s873 + $0x48] sm:$0xff] %v884
                  %v886 = vld [vmem:[%s872 + $0x30] sm:$0xff]
                  %887 = vst [vmem:[%s873 + $0x50] sm:$0xff] %v886
                  %v888 = vld [vmem:[%s872 + $0x38] sm:$0xff]
                  %889 = vst [vmem:[%s873 + $0x58] sm:$0xff] %v888
                  %v890 = vld [vmem:[%s872 + $0x40] sm:$0xff]
                  %891 = vst [vmem:[%s873 + $0x80] sm:$0xff] %v890
                  %v892 = vld [vmem:[%s872 + $0x48] sm:$0xff]
                  %893 = vst [vmem:[%s873 + $0x88] sm:$0xff] %v892
                  %v894 = vld [vmem:[%s872 + $0x50] sm:$0xff]
                  %895 = vst [vmem:[%s873 + $0x90] sm:$0xff] %v894
                  %v896 = vld [vmem:[%s872 + $0x58] sm:$0xff]
                  %897 = vst [vmem:[%s873 + $0x98] sm:$0xff] %v896
                  %v898 = vld [vmem:[%s872 + $0x60] sm:$0xff]
                  %899 = vst [vmem:[%s873 + $0xc0] sm:$0xff] %v898
                  %v900 = vld [vmem:[%s872 + $0x68] sm:$0xff]
                  %901 = vst [vmem:[%s873 + $0xc8] sm:$0xff] %v900
                  %v902 = vld [vmem:[%s872 + $0x70] sm:$0xff]
                  %903 = vst [vmem:[%s873 + $0xd0] sm:$0xff] %v902
                  %v904 = vld [vmem:[%s872 + $0x78] sm:$0xff]
                  %905 = vst [vmem:[%s873 + $0xd8] sm:$0xff] %v904
                $region144: #{tpu_custom_call.1} parent=138 // loop_footer
                  %s871 = sadd.s32 1, %s867
                $region145: #{tpu_custom_call.1} parent=138 // loop_footer_branch
                  %866 = sbr.rel target = $region141
                $region146: #{tpu_custom_call.1} parent=138 // loop_exit
                  _
              $region139: #{tpu_custom_call.1} parent=123 // pred_fallthru
                _
              // Predicated region
              $region147: #{tpu_custom_call.1} parent=123 // pred_check
                _
              $region148: #{tpu_custom_call.1} parent=123 // pred_check_branch
                %907 = sbr.rel target = $region150
              $region149: #{tpu_custom_call.1} parent=123 // pred_region
                _
              $region150: #{tpu_custom_call.1} parent=123 // pred_fallthru
                _
            $region124: #{tpu_custom_call.1} parent=119 // pred_fallthru
              _
            // Predicated region
            $region125: #{tpu_custom_call.1} parent=119 // pred_check
              _
            $region126: #{tpu_custom_call.1} parent=119 // pred_check_branch
              %821 = sbr.rel target = $region128
            $region127: #{tpu_custom_call.1} parent=119 // pred_region
              %s823 = ssub.s32 256, 1
              loop: start=0, step=1, limit=1
              $region129: #{tpu_custom_call.1} parent=127 // loop_pre_header
                _
              $region130: #{tpu_custom_call.1} parent=127 // loop_header
                %s825 = sphi 0, %s829
                %p826 = scmp.ge.s32.totalorder %s825, 1
                %s830 = sphi %s605, %s605
                %s831 = sphi %s815, %s815
              $region131: #{tpu_custom_call.1} parent=127 // loop_header_branch
                %828 = sbr.rel (%p826) target = $region135
              $region132: #{tpu_custom_call.1} parent=127 // loop_body
                %v832 = vld [vmem:[%s830] sm:%s823]
                %833 = vst [vmem:[%s831] sm:%s823] %v832
                %v834 = vld [vmem:[%s830 + $0x8] sm:%s823]
                %835 = vst [vmem:[%s831 + $0x8] sm:%s823] %v834
                %v836 = vld [vmem:[%s830 + $0x10] sm:%s823]
                %837 = vst [vmem:[%s831 + $0x10] sm:%s823] %v836
                %v838 = vld [vmem:[%s830 + $0x18] sm:%s823]
                %839 = vst [vmem:[%s831 + $0x18] sm:%s823] %v838
                %v840 = vld [vmem:[%s830 + $0x20] sm:%s823]
                %841 = vst [vmem:[%s831 + $0x40] sm:%s823] %v840
                %v842 = vld [vmem:[%s830 + $0x28] sm:%s823]
                %843 = vst [vmem:[%s831 + $0x48] sm:%s823] %v842
                %v844 = vld [vmem:[%s830 + $0x30] sm:%s823]
                %845 = vst [vmem:[%s831 + $0x50] sm:%s823] %v844
                %v846 = vld [vmem:[%s830 + $0x38] sm:%s823]
                %847 = vst [vmem:[%s831 + $0x58] sm:%s823] %v846
                %v848 = vld [vmem:[%s830 + $0x40] sm:%s823]
                %849 = vst [vmem:[%s831 + $0x80] sm:%s823] %v848
                %v850 = vld [vmem:[%s830 + $0x48] sm:%s823]
                %851 = vst [vmem:[%s831 + $0x88] sm:%s823] %v850
                %v852 = vld [vmem:[%s830 + $0x50] sm:%s823]
                %853 = vst [vmem:[%s831 + $0x90] sm:%s823] %v852
                %v854 = vld [vmem:[%s830 + $0x58] sm:%s823]
                %855 = vst [vmem:[%s831 + $0x98] sm:%s823] %v854
                %v856 = vld [vmem:[%s830 + $0x60] sm:%s823]
                %857 = vst [vmem:[%s831 + $0xc0] sm:%s823] %v856
                %v858 = vld [vmem:[%s830 + $0x68] sm:%s823]
                %859 = vst [vmem:[%s831 + $0xc8] sm:%s823] %v858
                %v860 = vld [vmem:[%s830 + $0x70] sm:%s823]
                %861 = vst [vmem:[%s831 + $0xd0] sm:%s823] %v860
                %v862 = vld [vmem:[%s830 + $0x78] sm:%s823]
                %863 = vst [vmem:[%s831 + $0xd8] sm:%s823] %v862
              $region133: #{tpu_custom_call.1} parent=127 // loop_footer
                %s829 = sadd.s32 1, %s825
              $region134: #{tpu_custom_call.1} parent=127 // loop_footer_branch
                %824 = sbr.rel target = $region130
              $region135: #{tpu_custom_call.1} parent=127 // loop_exit
                _
            $region128: #{tpu_custom_call.1} parent=119 // pred_fallthru
              _
          $region120: #{tpu_custom_call.1} parent=115 // pred_fallthru
            _
          %908 = vnop
        $region116: #{tpu_custom_call.1} parent=35 // pred_fallthru
          _
      $region36: #{tpu_custom_call.1} parent=5 // pred_fallthru
        _
      %p909 = scmp.le.s32.totalorder 2, %s13
      // Predicated region
      $region151: #{tpu_custom_call.1} parent=5 // pred_check
        %p910 = pneg %p909
      $region152: #{tpu_custom_call.1} parent=5 // pred_check_branch
        %912 = sbr.rel (%p910) target = $region154
      $region153: #{tpu_custom_call.1} parent=5 // pred_region
        %s913 = ssub.s32 %s13, 2
        // Predicated region
        $region155: #{tpu_custom_call.1} parent=153 // pred_check
          %p914 = pneg %p147
        $region156: #{tpu_custom_call.1} parent=153 // pred_check_branch
          %916 = sbr.rel (%p914) target = $region158
        $region157: #{tpu_custom_call.1} parent=153 // pred_region
          %s917 = sand.u32 %s132, 1
          %s918 = sand.u32 %s132, 1
          %s919 = smul.addr %s918, 128
          %s920 = scalar_lea.vmem [#allocation2], %s919
        $region158: #{tpu_custom_call.1} parent=153 // pred_fallthru
          _
        // Predicated region
        $region159: #{tpu_custom_call.1} parent=153 // pred_check
          %p921 = pneg %p175
        $region160: #{tpu_custom_call.1} parent=153 // pred_check_branch
          %923 = sbr.rel (%p921) target = $region162
        $region161: #{tpu_custom_call.1} parent=153 // pred_region
          %s924 = sand.u32 %s160, 1
          %s925 = sand.u32 %s160, 1
          %s926 = smul.addr %s925, 128
          %s927 = scalar_lea.vmem [#allocation3], %s926
        $region162: #{tpu_custom_call.1} parent=153 // pred_fallthru
          _
        // Predicated region
        $region163: #{tpu_custom_call.1} parent=153 // pred_check
          %p928 = pneg %p203
        $region164: #{tpu_custom_call.1} parent=153 // pred_check_branch
          %930 = sbr.rel (%p928) target = $region166
        $region165: #{tpu_custom_call.1} parent=153 // pred_region
          %s931 = sand.u32 %s188, 1
          %s932 = sand.u32 %s188, 1
          %s933 = smul.addr %s932, 128
          %s934 = scalar_lea.vmem [#allocation4], %s933
        $region166: #{tpu_custom_call.1} parent=153 // pred_fallthru
          _
      $region154: #{tpu_custom_call.1} parent=5 // pred_fallthru
        _
    $region6: #{tpu_custom_call.1} parent=1 // loop_footer
      %s17 = sadd.s32 1, %s13
    $region7: #{tpu_custom_call.1} parent=1 // loop_footer_branch
      %12 = sbr.rel target = $region3
    $region8: #{tpu_custom_call.1} parent=1 // loop_exit
      _

</llo_original>
